<compile_context>
chip_gen: v7x
topology: tpu7x:2x2x1
jax: 0.10.0
libtpu: 0.0.40
codegen_flags: <defaults>
</compile_context>

<pallas_src>
import jax
import jax.numpy as jnp
from jax.experimental import pallas as pl
from jax.experimental.pallas import tpu as pltpu


# ----------------------------- kernel factory ------------------------------ #

def _make_sse_kernel(rows, lanes, m_valid, has_fine):
    """Sum-of-squared-errors kernel over a [M, lanes] view.

    Accumulates per-lane partial sums into a resident (8, lanes) f32 block.
    `m_valid` (static) is the number of valid rows; rows beyond it (only ever
    present in the last, partial grid block) are masked out.
    """
    folds = rows // 8
    ragged = (m_valid % rows) != 0

    def _fold(sq):
        # Sublane-major fold (rows, lanes) -> (rows//8, 8, lanes) -> sum axis 0.
        # 8-row-aligned split: lowers to plain VPU adds, no relayout expected.
        if folds == 1:
            return sq
        return jnp.sum(sq.reshape(folds, 8, lanes), axis=0)

    def kernel(*refs):
        if has_fine:
            c_ref, f_ref, t_ref, out_ref = refs
        else:
            c_ref, t_ref, out_ref = refs

        k = pl.program_id(0)

        @pl.when(k == 0)
        def _():
            out_ref[...] = jnp.zeros_like(out_ref)

        t = t_ref[...]
        # Difference in native dtype (bf16 VPU is native on v6e/v7x), one cast
        # to f32, square + accumulate in f32.
        dc = (c_ref[...] - t).astype(jnp.float32)
        sq = dc * dc
        if has_fine:
            df = (f_ref[...] - t).astype(jnp.float32)
            sq = sq + df * df

        if ragged:
            is_last = k == pl.num_programs(0) - 1

            @pl.when(jnp.logical_not(is_last))
            def _():
                out_ref[...] += _fold(sq)

            @pl.when(is_last)
            def _():
                row_ids = k * rows + jax.lax.broadcasted_iota(
                    jnp.int32, (rows, lanes), 0)
                out_ref[...] += _fold(jnp.where(row_ids < m_valid, sq, 0.0))
        else:
            out_ref[...] += _fold(sq)

    return kernel


# --------------------------- pallas_call wrapper --------------------------- #

def _sse_partial_sums(coarse2d, targets2d, fine2d, *, rows, lanes):
    """Returns (8, lanes) f32 per-lane partial sums of squared errors
    (coarse + fine combined when fine2d is provided)."""
    m, l = coarse2d.shape
    assert l == lanes
    assert rows % 8 == 0 and lanes % 128 == 0

    has_fine = fine2d is not None
    num_blocks = pl.cdiv(m, rows)

    in_spec = pl.BlockSpec((rows, lanes), lambda k: (k, 0))
    out_spec = pl.BlockSpec((8, lanes), lambda k: (0, 0))

    operands = (coarse2d, fine2d, targets2d) if has_fine else (coarse2d, targets2d)
    in_specs = [in_spec] * len(operands)

    n_el = m * lanes
    bytes_accessed = int(sum(int(x.size) * x.dtype.itemsize for x in operands)
                         + 8 * lanes * 4)
    flops = int((7 if has_fine else 4) * n_el)

    kernel = _make_sse_kernel(rows, lanes, m, has_fine)

    return pl.pallas_call(
        kernel,
        out_shape=jax.ShapeDtypeStruct((8, lanes), jnp.float32),
        grid_spec=pltpu.PrefetchScalarGridSpec(
            num_scalar_prefetch=0,
            grid=(num_blocks,),
            in_specs=in_specs,
            out_specs=out_spec,
        ),
        compiler_params=pltpu.CompilerParams(
            dimension_semantics=("arbitrary",),
            vmem_limit_bytes=32 * 1024 * 1024,
        ),
        cost_estimate=pl.CostEstimate(
            flops=flops, transcendentals=0, bytes_accessed=bytes_accessed),
    )(*operands)


def smmse_loss(inputs, targets, *, max_rows=512):
    """JAX/Pallas equivalent of SMMSELoss.forward.

    inputs:  dict with 'sm_coarse' (and optionally 'sm_fine'), same shape as targets
    targets: arbitrary-shaped array
    """
    sm_coarse = inputs["sm_coarse"]
    sm_fine = inputs.get("sm_fine", None)
    assert sm_coarse.shape == targets.shape
    assert max_rows % 8 == 0

    n = targets.size

    # Largest lane width that divides n -> copy-free metadata reshape.
    lanes = next((c for c in (512, 256, 128) if n % c == 0), None)

    if lanes is None:
        # TODO(synk): n not a multiple of 128 -- minimal zero-pad (<128 padded
        # elements, each contributing (0-0)^2 = 0) still copies the arrays once;
        # a fully copy-free ragged path would need 1-D blocks + element masking.
        lanes = 128
        pad = (-n) % lanes

        def prep(x):
            return jnp.pad(jnp.ravel(x), (0, pad)).reshape(-1, lanes)
    else:
        def prep(x):
            # Contiguous ravel + reshape: metadata-only, no HBM copy.
            return jnp.ravel(x).reshape(-1, lanes)

    c2 = prep(sm_coarse)
    t2 = prep(targets)
    f2 = prep(sm_fine) if sm_fine is not None else None

    m = c2.shape[0]
    rows = min(max_rows, ((m + 7) // 8) * 8)   # adaptive: no wasted work on small n

    sse = _sse_partial_sums(c2, t2, f2, rows=rows, lanes=lanes)

    # mean_c + mean_f == (sse_c + sse_f) / n  (both means share the same n).
    return jnp.sum(sse) * jnp.float32(1.0 / n)


# ------------------------------ reference ---------------------------------- #

def _reference_smmse(inputs, targets):
    t = targets.astype(jnp.float32)
    c = inputs["sm_coarse"].astype(jnp.float32)
    loss = jnp.mean((c - t) ** 2)
    if "sm_fine" in inputs:
        f = inputs["sm_fine"].astype(jnp.float32)
        loss = loss + jnp.mean((f - t) ** 2)
    return loss


if __name__ == "__main__":
    key = jax.random.PRNGKey(0)
    k_c, k_f, k_t = jax.random.split(key, 3)

    B, R = 2, 1024  # batch of 2 images, 1024 rays each -> 2048 sm values
    targets = jax.random.uniform(k_t, (B, R), dtype=jnp.float32)
    sm_coarse = jax.random.uniform(k_c, (B, R), dtype=jnp.float32)
    sm_fine = jax.random.uniform(k_f, (B, R), dtype=jnp.float32)

    # 1) coarse + fine, copy-free aligned path (lanes=512, masked ragged last block)
    inputs_cf = {"sm_coarse": sm_coarse, "sm_fine": sm_fine}
    out1 = jax.block_until_ready(smmse_loss(inputs_cf, targets))
    ref1 = jax.block_until_ready(_reference_smmse(inputs_cf, targets))
    assert jnp.allclose(out1, ref1, rtol=1e-5, atol=1e-5), (out1, ref1)

    # 2) coarse only (separate kernel variant, no fine stream from HBM)
    inputs_c = {"sm_coarse": sm_coarse}
    out2 = jax.block_until_ready(smmse_loss(inputs_c, targets))
    ref2 = jax.block_until_ready(_reference_smmse(inputs_c, targets))
    assert jnp.allclose(out2, ref2, rtol=1e-5, atol=1e-5), (out2, ref2)

    # 3) bf16 inputs streamed natively; bf16 differences, f32 square/accumulate
    inputs_bf = {"sm_coarse": sm_coarse.astype(jnp.bfloat16),
                 "sm_fine": sm_fine.astype(jnp.bfloat16)}
    targets_bf = targets.astype(jnp.bfloat16)
    out3 = jax.block_until_ready(smmse_loss(inputs_bf, targets_bf))
    ref3 = jax.block_until_ready(_reference_smmse(inputs_bf, targets_bf))
    assert jnp.allclose(out3, ref3, rtol=2e-3, atol=2e-3), (out3, ref3)

    # 4) ragged size (n % 128 != 0) -> minimal-pad fallback path
    kr_c, kr_f, kr_t = jax.random.split(jax.random.PRNGKey(1), 3)
    t_r = jax.random.uniform(kr_t, (1000,), dtype=jnp.float32)
    inputs_r = {"sm_coarse": jax.random.uniform(kr_c, (1000,), dtype=jnp.float32),
                "sm_fine": jax.random.uniform(kr_f, (1000,), dtype=jnp.float32)}
    out4 = jax.block_until_ready(smmse_loss(inputs_r, t_r))
    ref4 = jax.block_until_ready(_reference_smmse(inputs_r, t_r))
    assert jnp.allclose(out4, ref4, rtol=1e-5, atol=1e-5), (out4, ref4)

    # 5) larger aligned tensor, multi-step reduction grid (resident accumulator)
    km_c, km_f, km_t = jax.random.split(jax.random.PRNGKey(2), 3)
    t_m = jax.random.uniform(km_t, (16, 2048), dtype=jnp.float32)
    inputs_m = {"sm_coarse": jax.random.uniform(km_c, (16, 2048), dtype=jnp.float32),
                "sm_fine": jax.random.uniform(km_f, (16, 2048), dtype=jnp.float32)}
    out5 = jax.block_until_ready(smmse_loss(inputs_m, t_m, max_rows=16))
    ref5 = jax.block_until_ready(_reference_smmse(inputs_m, t_m))
    assert jnp.allclose(out5, ref5, rtol=1e-5, atol=1e-5), (out5, ref5)

    print("KERNEL_OK")
</pallas_src>

<mosaic_0001>
module attributes {stable_mosaic.version = 11 : i64} {
  func.func @kernel(%arg0: i32, %arg1: memref<8x512xf32, #tpu.memory_space<vmem>>, %arg2: memref<8x512xf32, #tpu.memory_space<vmem>>, %arg3: memref<8x512xf32, #tpu.memory_space<vmem>>, %arg4: memref<8x512xf32, #tpu.memory_space<vmem>>) attributes {dimension_semantics = [#tpu.dimension_semantics<arbitrary>], iteration_bounds = array<i64: 1>, scalar_prefetch = 0 : i64, scratch_operands = 0 : i64, tpu.core_type = #tpu.core_type<tc>, window_params = [{transform_indices = @transform_0, window_bounds = array<i64: 8, 512>}, {transform_indices = @transform_1, window_bounds = array<i64: 8, 512>}, {transform_indices = @transform_2, window_bounds = array<i64: 8, 512>}, {pipeline_mode = #tpu.pipeline_mode<synchronous>, transform_indices = @transform_3, window_bounds = array<i64: 8, 512>}]} {
    %c0_i32 = arith.constant 0 : i32
    %0 = arith.cmpi eq, %arg0, %c0_i32 : i32
    %1 = arith.extui %0 : i1 to i32
    %c0_i32_0 = arith.constant 0 : i32
    %2 = arith.cmpi ne, %1, %c0_i32_0 : i32
    scf.if %2 {
      %cst = arith.constant 0.000000e+00 : f32
      %17 = vector.broadcast %cst : f32 to vector<8x512xf32>
      %c0_9 = arith.constant 0 : index
      %c0_10 = arith.constant 0 : index
      %18 = vector.load %arg4[%c0_9, %c0_10] : memref<8x512xf32, #tpu.memory_space<vmem>>, vector<8x512xf32>
      tpu.vector_store %arg4[%c0_9, %c0_10], %17 {strides = array<i32>} : memref<8x512xf32, #tpu.memory_space<vmem>>, vector<8x512xf32>,
    } else {
    }
    %c0 = arith.constant 0 : index
    %c0_1 = arith.constant 0 : index
    %3 = vector.load %arg3[%c0, %c0_1] : memref<8x512xf32, #tpu.memory_space<vmem>>, vector<8x512xf32>
    %c0_2 = arith.constant 0 : index
    %c0_3 = arith.constant 0 : index
    %4 = vector.load %arg1[%c0_2, %c0_3] : memref<8x512xf32, #tpu.memory_space<vmem>>, vector<8x512xf32>
    %5 = arith.subf %4, %3 : vector<8x512xf32>
    %6 = arith.mulf %5, %5 : vector<8x512xf32>
    %c0_4 = arith.constant 0 : index
    %c0_5 = arith.constant 0 : index
    %7 = vector.load %arg2[%c0_4, %c0_5] : memref<8x512xf32, #tpu.memory_space<vmem>>, vector<8x512xf32>
    %8 = arith.subf %7, %3 : vector<8x512xf32>
    %9 = arith.mulf %8, %8 : vector<8x512xf32>
    %10 = arith.addf %6, %9 : vector<8x512xf32>
    %c0_i32_6 = arith.constant 0 : i32
    %11 = arith.cmpi eq, %arg0, %c0_i32_6 : i32
    %true = arith.constant true
    %12 = arith.xori %11, %true : i1
    %13 = arith.extui %12 : i1 to i32
    %c0_i32_7 = arith.constant 0 : i32
    %14 = arith.cmpi ne, %13, %c0_i32_7 : i32
    scf.if %14 {
      %c0_9 = arith.constant 0 : index
      %c0_10 = arith.constant 0 : index
      %17 = vector.load %arg4[%c0_9, %c0_10] : memref<8x512xf32, #tpu.memory_space<vmem>>, vector<8x512xf32>
      %18 = arith.addf %17, %10 : vector<8x512xf32>
      %c0_11 = arith.constant 0 : index
      %c0_12 = arith.constant 0 : index
      %19 = vector.load %arg4[%c0_11, %c0_12] : memref<8x512xf32, #tpu.memory_space<vmem>>, vector<8x512xf32>
      tpu.vector_store %arg4[%c0_11, %c0_12], %18 {strides = array<i32>} : memref<8x512xf32, #tpu.memory_space<vmem>>, vector<8x512xf32>,
    } else {
    }
    %15 = arith.extui %11 : i1 to i32
    %c0_i32_8 = arith.constant 0 : i32
    %16 = arith.cmpi ne, %15, %c0_i32_8 : i32
    scf.if %16 {
      %c8_i32 = arith.constant 8 : i32
      %17 = arith.muli %arg0, %c8_i32 : i32
      %18 = tpu.iota {dimensions = array<i32: 0>} : vector<8x512xi32>
      %19 = vector.broadcast %17 : i32 to vector<8x512xi32>
      %20 = arith.addi %19, %18 : vector<8x512xi32>
      %c0_9 = arith.constant 0 : index
      %c0_10 = arith.constant 0 : index
      %21 = vector.load %arg4[%c0_9, %c0_10] : memref<8x512xf32, #tpu.memory_space<vmem>>, vector<8x512xf32>
      %c4_i32 = arith.constant 4 : i32
      %22 = vector.broadcast %c4_i32 : i32 to vector<8x512xi32>
      %23 = arith.cmpi slt, %20, %22 : vector<8x512xi32>
      %cst = arith.constant 0.000000e+00 : f32
      %24 = vector.broadcast %cst : f32 to vector<8x512xf32>
      %25 = arith.select %23, %10, %24 : vector<8x512xi1>, vector<8x512xf32>
      %26 = arith.addf %21, %25 : vector<8x512xf32>
      %c0_11 = arith.constant 0 : index
      %c0_12 = arith.constant 0 : index
      %27 = vector.load %arg4[%c0_11, %c0_12] : memref<8x512xf32, #tpu.memory_space<vmem>>, vector<8x512xf32>
      tpu.vector_store %arg4[%c0_11, %c0_12], %26 {strides = array<i32>} : memref<8x512xf32, #tpu.memory_space<vmem>>, vector<8x512xf32>,
    } else {
    }
    return
  }
  func.func @transform_0(%arg0: i32) -> (i32, i32) {
    %c0_i32 = arith.constant 0 : i32
    %c0_i32_0 = arith.constant 0 : i32
    return %arg0, %c0_i32 : i32, i32
  }
  func.func @transform_1(%arg0: i32) -> (i32, i32) {
    %c0_i32 = arith.constant 0 : i32
    %c0_i32_0 = arith.constant 0 : i32
    return %arg0, %c0_i32 : i32, i32
  }
  func.func @transform_2(%arg0: i32) -> (i32, i32) {
    %c0_i32 = arith.constant 0 : i32
    %c0_i32_0 = arith.constant 0 : i32
    return %arg0, %c0_i32 : i32, i32
  }
  func.func @transform_3(%arg0: i32) -> (i32, i32) {
    %c0_i32 = arith.constant 0 : i32
    %c0_i32_0 = arith.constant 0 : i32
    %c0_i32_1 = arith.constant 0 : i32
    return %c0_i32, %c0_i32_0 : i32, i32
  }
}

</mosaic_0001>

<llo_original>
// kernel: tpu_custom_call.1
$region0: #{tpu_custom_call.1}
  #allocation0 [shape = 'u32[]', space=smem, size = 0x4, offset = 0x4, fixed_abs, tag = 'smem constant byte address 0x4 - core index']
  #allocation1 [shape = 'u32[144,128]{1,0:T(1,128)}', space=vmem, size = 0x12000, scoped, tag = 'internal scratch']
  %s0 = inlined_call_operand.hbm [shape: f32[4,512], index: 0, kind: input, shape index: {}]
  %s1 = inlined_call_operand.hbm [shape: f32[4,512], index: 1, kind: input, shape index: {}]
  %s2 = inlined_call_operand.hbm [shape: f32[4,512], index: 2, kind: input, shape index: {}]
  %s3 = inlined_call_operand.hbm [shape: f32[8,512], index: 3, kind: output, shape index: {}]
  %s4 = sld [smem:[#allocation0]]
  $region46: #{tpu_custom_call.1} parent=0
    _
  %s6 = ssub.s32 1, %s4
  %s7 = scalar_select 0, %s6, %s4
  $region1: #{tpu_custom_call.1} parent=0
    #allocation2 [shape = 'u8[16384]{0}', space=vmem, size = 0x4000, scoped, tag = 'input window, operand 0, single buffered']
    #allocation3 [shape = 's32[1]{0}', space=sflag, size = 0x4, scoped, tag = 'scoped memory for tpu_custom_call.1']
    #allocation4 [shape = 's32[1]{0}', space=sflag, size = 0x4, scoped, tag = 'scoped memory for tpu_custom_call.1']
    #allocation5 [shape = 'u8[16384]{0}', space=vmem, size = 0x4000, scoped, tag = 'input window, operand 1, single buffered']
    #allocation6 [shape = 's32[1]{0}', space=sflag, size = 0x4, scoped, tag = 'scoped memory for tpu_custom_call.1']
    #allocation7 [shape = 'u8[16384]{0}', space=vmem, size = 0x4000, scoped, tag = 'input window, operand 2, single buffered']
    #allocation8 [shape = 'u8[16384]{0}', space=vmem, size = 0x4000, scoped, tag = 'output window, operand 0, single buffered']
    %8 = vsyncpa [#allocation3], 0
    %9 = vsyncpa [#allocation6], 0
    %10 = vsyncpa [#allocation4], 0
    // Predicated region
    $region2: #{tpu_custom_call.1} parent=1 // pred_check
      _
    $region3: #{tpu_custom_call.1} parent=1 // pred_check_branch
      %12 = sbr.rel (0) target = $region5
    $region4: #{tpu_custom_call.1} parent=1 // pred_region
      %s14 = ssub.s32 512, 256
      %15 = vsyncadd [#allocation3], %s14
      %s16 = sshll.u32 [#allocation2], 4
      %s17 = int_to_ptr.vmem [resolvable:$true] %s16
      %22 = dma.hbm_to_vmem [thread:$0]  %s0, 256, %s17, [#allocation3], 256, 256, 16
    $region5: #{tpu_custom_call.1} parent=1 // pred_fallthru
      _
    // Predicated region
    $region6: #{tpu_custom_call.1} parent=1 // pred_check
      _
    $region7: #{tpu_custom_call.1} parent=1 // pred_check_branch
      %24 = sbr.rel (0) target = $region9
    $region8: #{tpu_custom_call.1} parent=1 // pred_region
      %s26 = ssub.s32 512, 256
      %27 = vsyncadd [#allocation6], %s26
      %s28 = sshll.u32 [#allocation5], 4
      %s29 = int_to_ptr.vmem [resolvable:$true] %s28
      %34 = dma.hbm_to_vmem [thread:$0]  %s1, 256, %s29, [#allocation6], 256, 256, 16
    $region9: #{tpu_custom_call.1} parent=1 // pred_fallthru
      _
    // Predicated region
    $region10: #{tpu_custom_call.1} parent=1 // pred_check
      _
    $region11: #{tpu_custom_call.1} parent=1 // pred_check_branch
      %36 = sbr.rel (0) target = $region13
    $region12: #{tpu_custom_call.1} parent=1 // pred_region
      %s38 = ssub.s32 512, 256
      %39 = vsyncadd [#allocation6], %s38
      %s40 = sshll.u32 [#allocation7], 4
      %s41 = int_to_ptr.vmem [resolvable:$true] %s40
      %46 = dma.hbm_to_vmem [thread:$0]  %s2, 256, %s41, [#allocation6], 256, 256, 16
    $region13: #{tpu_custom_call.1} parent=1 // pred_fallthru
      _
    // Predicated region
    $region14: #{tpu_custom_call.1} parent=1 // pred_check
      _
    $region15: #{tpu_custom_call.1} parent=1 // pred_check_branch
      %48 = sbr.rel (0) target = $region17
    $region16: #{tpu_custom_call.1} parent=1 // pred_region
      %49 = dma.done [#allocation3], 512
    $region17: #{tpu_custom_call.1} parent=1 // pred_fallthru
      _
    // Predicated region
    $region18: #{tpu_custom_call.1} parent=1 // pred_check
      _
    $region19: #{tpu_custom_call.1} parent=1 // pred_check_branch
      %51 = sbr.rel (0) target = $region21
    $region20: #{tpu_custom_call.1} parent=1 // pred_region
      %52 = dma.done [#allocation6], 512
    $region21: #{tpu_custom_call.1} parent=1 // pred_fallthru
      _
    // Predicated region
    $region22: #{tpu_custom_call.1} parent=1 // pred_check
      _
    $region23: #{tpu_custom_call.1} parent=1 // pred_check_branch
      %54 = sbr.rel (0) target = $region25
    $region24: #{tpu_custom_call.1} parent=1 // pred_region
      %55 = dma.done [#allocation6], 512
    $region25: #{tpu_custom_call.1} parent=1 // pred_fallthru
      _
    %p56 = scmp.eq.s32.totalorder 0, 0
    // Predicated region
    $region26: #{tpu_custom_call.1} parent=1 // pred_check
      %p57 = pneg %p56
    $region27: #{tpu_custom_call.1} parent=1 // pred_check_branch
      %59 = sbr.rel (%p57) target = $region29
    $region28: #{tpu_custom_call.1} parent=1 // pred_region
      %60 = vst [vmem:[#allocation8] sm:$0xff] 0.0
      %61 = vst [vmem:[#allocation8 + $0x8] sm:$0xff] 0.0
      %62 = vst [vmem:[#allocation8 + $0x10] sm:$0xff] 0.0
      %63 = vst [vmem:[#allocation8 + $0x18] sm:$0xff] 0.0
    $region29: #{tpu_custom_call.1} parent=1 // pred_fallthru
      _
    %v64 = vld [vmem:[#allocation7] sm:$0xff]
    %v65 = vld [vmem:[#allocation7 + $0x8] sm:$0xff]
    %v66 = vld [vmem:[#allocation7 + $0x10] sm:$0xff]
    %v67 = vld [vmem:[#allocation7 + $0x18] sm:$0xff]
    %v68 = vld [vmem:[#allocation2] sm:$0xff]
    %v69 = vld [vmem:[#allocation2 + $0x8] sm:$0xff]
    %v70 = vld [vmem:[#allocation2 + $0x10] sm:$0xff]
    %v71 = vld [vmem:[#allocation2 + $0x18] sm:$0xff]
    %v72 = vsub.f32 %v68, %v64
    %v73 = vsub.f32 %v69, %v65
    %v74 = vsub.f32 %v70, %v66
    %v75 = vsub.f32 %v71, %v67
    %v76 = vmul.f32 %v72, %v72
    %v77 = vmul.f32 %v73, %v73
    %v78 = vmul.f32 %v74, %v74
    %v79 = vmul.f32 %v75, %v75
    %v80 = vld [vmem:[#allocation5] sm:$0xff]
    %v81 = vld [vmem:[#allocation5 + $0x8] sm:$0xff]
    %v82 = vld [vmem:[#allocation5 + $0x10] sm:$0xff]
    %v83 = vld [vmem:[#allocation5 + $0x18] sm:$0xff]
    %v84 = vsub.f32 %v80, %v64
    %v85 = vsub.f32 %v81, %v65
    %v86 = vsub.f32 %v82, %v66
    %v87 = vsub.f32 %v83, %v67
    %v88 = vmul.f32 %v84, %v84
    %v89 = vmul.f32 %v85, %v85
    %v90 = vmul.f32 %v86, %v86
    %v91 = vmul.f32 %v87, %v87
    %v92 = vadd.f32 %v76, %v88
    %v93 = vadd.f32 %v77, %v89
    %v94 = vadd.f32 %v78, %v90
    %v95 = vadd.f32 %v79, %v91
    %p96 = scmp.ne.s32.totalorder 0, 0
    // Predicated region
    $region30: #{tpu_custom_call.1} parent=1 // pred_check
      %p97 = pneg %p96
    $region31: #{tpu_custom_call.1} parent=1 // pred_check_branch
      %99 = sbr.rel (%p97) target = $region33
    $region32: #{tpu_custom_call.1} parent=1 // pred_region
      %v100 = vld [vmem:[#allocation8] sm:$0xff]
      %v101 = vld [vmem:[#allocation8 + $0x8] sm:$0xff]
      %v102 = vld [vmem:[#allocation8 + $0x10] sm:$0xff]
      %v103 = vld [vmem:[#allocation8 + $0x18] sm:$0xff]
      %v108 = vcombine.low %v92, %v94
      %v109 = vcombine.high %v92, %v94
      %v110 = vcombine.low %v93, %v95
      %v111 = vcombine.high %v93, %v95
      %v116 = vadd.f32 %v100, %v108
      %v117 = vadd.f32 %v101, %v109
      %v118 = vadd.f32 %v102, %v110
      %v119 = vadd.f32 %v103, %v111
      %120 = vst [vmem:[#allocation8] sm:$0xff] %v116
      %121 = vst [vmem:[#allocation8 + $0x8] sm:$0xff] %v117
      %122 = vst [vmem:[#allocation8 + $0x10] sm:$0xff] %v118
      %123 = vst [vmem:[#allocation8 + $0x18] sm:$0xff] %v119
    $region33: #{tpu_custom_call.1} parent=1 // pred_fallthru
      _
    // Predicated region
    $region34: #{tpu_custom_call.1} parent=1 // pred_check
      %p124 = pneg %p56
    $region35: #{tpu_custom_call.1} parent=1 // pred_check_branch
      %126 = sbr.rel (%p124) target = $region37
    $region36: #{tpu_custom_call.1} parent=1 // pred_region
      %s127 = smul.u32 0, 8
      %v128 = vlaneseq
      %v129 = vshrl.u32 %v128, 7
      %v130 = vstv %s127
      %v131 = vadd.s32 %v130, %v129
      %v132 = vld [vmem:[#allocation8] sm:$0xff]
      %v133 = vld [vmem:[#allocation8 + $0x8] sm:$0xff]
      %v134 = vld [vmem:[#allocation8 + $0x10] sm:$0xff]
      %v135 = vld [vmem:[#allocation8 + $0x18] sm:$0xff]
      %vm136 = vcmp.lt.s32.totalorder %v131, 4
      %v141 = vcombine.low %v92, %v94
      %v142 = vcombine.high %v92, %v94
      %v143 = vcombine.low %v93, %v95
      %v144 = vcombine.high %v93, %v95
      %v149 = vsel %vm136, %v141, 0.0
      %v150 = vsel %vm136, %v142, 0.0
      %v151 = vsel %vm136, %v143, 0.0
      %v152 = vsel %vm136, %v144, 0.0
      %v153 = vadd.f32 %v132, %v149
      %v154 = vadd.f32 %v133, %v150
      %v155 = vadd.f32 %v134, %v151
      %v156 = vadd.f32 %v135, %v152
      %157 = vst [vmem:[#allocation8] sm:$0xff] %v153
      %158 = vst [vmem:[#allocation8 + $0x8] sm:$0xff] %v154
      %159 = vst [vmem:[#allocation8 + $0x10] sm:$0xff] %v155
      %160 = vst [vmem:[#allocation8 + $0x18] sm:$0xff] %v156
    $region37: #{tpu_custom_call.1} parent=1 // pred_fallthru
      _
    // Predicated region
    $region38: #{tpu_custom_call.1} parent=1 // pred_check
      _
    $region39: #{tpu_custom_call.1} parent=1 // pred_check_branch
      %162 = sbr.rel (0) target = $region41
    $region40: #{tpu_custom_call.1} parent=1 // pred_region
      %s164 = ssub.s32 512, 512
      %165 = vsyncadd [#allocation4], %s164
      %s167 = sshll.u32 [#allocation8], 4
      %s168 = int_to_ptr.vmem [resolvable:$true] %s167
      %170 = dma.vmem_to_hbm [thread:$0]  %s168, 512, %s3, [#allocation4]
    $region41: #{tpu_custom_call.1} parent=1 // pred_fallthru
      _
    // Predicated region
    $region42: #{tpu_custom_call.1} parent=1 // pred_check
      _
    $region43: #{tpu_custom_call.1} parent=1 // pred_check_branch
      %172 = sbr.rel (0) target = $region45
    $region44: #{tpu_custom_call.1} parent=1 // pred_region
      %173 = dma.done [#allocation4], 512
    $region45: #{tpu_custom_call.1} parent=1 // pred_fallthru
      _
    %174 = vsyncpa [#allocation3], 1
    %175 = vsyncpa [#allocation6], 1
    %176 = vsyncpa [#allocation4], 1

</llo_original>
